<compile_context>
chip_gen: v7x
topology: tpu7x:2x2x1
jax: 0.10.0
libtpu: 0.0.40
codegen_flags: <defaults>
</compile_context>

<pallas_src>
import functools

import jax
import jax.numpy as jnp
from jax.experimental import pallas as pl
from jax.experimental.pallas import tpu as pltpu

_SUBLANES = 8
_LANES = 128


def _round_up(x, m):
    return ((x + m - 1) // m) * m


def _vmem_capacity_bytes():
    """Per-core VMEM capacity; conservative 64 MiB (v7x) fallback."""
    try:
        info = pltpu.get_tpu_info()
        cap = getattr(info, "vmem_capacity_bytes", None)
        if cap:
            return int(cap)
    except Exception:
        pass
    return 64 * 1024 * 1024


def _plan_tiles(n, c, l1, l2, transposed):
    """Pick the per-step batch tile `bn` and lane-dense MSE slab tiles so the
    (8,128)-padded, double-buffered VMEM working set fits a per-chip budget."""
    cap = _vmem_capacity_bytes()
    budget = min(max(cap // 3, 16 << 20), 48 << 20)

    lane_step = _LANES if transposed else _SUBLANES

    def plan(bn):
        n_tiles = max(1, -(-n // bn))
        if transposed:
            # logits tile (C, bn): C pads to sublanes, bn is lane-dense.
            c_s = _round_up(c, _SUBLANES)
            ce_in = (c_s * bn + _SUBLANES * bn) * 4          # logits + target
            ce_acc = 2 * c_s * bn * 4                        # num + den accumulators
            w_bytes = c_s * _LANES * 4                       # (C,1) weight, resident
        else:
            # logits tile (bn, C): C pads to lanes, bn to sublanes.
            c_l = _round_up(c, _LANES)
            ce_in = (bn * c_l + bn * _LANES) * 4
            ce_acc = 2 * bn * c_l * 4
            w_bytes = _SUBLANES * c_l * 4
        trs = []
        mse_in = 0
        mse_acc = 0
        for l in (l1, l2):
            r = -(-l // _LANES)                              # lane-dense slab rows
            tr = _round_up(-(-r // n_tiles), _SUBLANES)      # rows per grid step
            trs.append(tr)
            mse_in += 2 * tr * _LANES * 4                    # de + ori tiles
            mse_acc += tr * _LANES * 4
        total = (2 * (ce_in + mse_in)                        # double-buffered inputs
                 + ce_acc + mse_acc + w_bytes
                 + 2 * _SUBLANES * _LANES * 4)               # output block
        return total, n_tiles, trs

    bn = _round_up(min(max(n, 1), 4096), lane_step)
    while bn > lane_step and plan(bn)[0] > budget:
        bn -= lane_step

    total, n_tiles, (tr1, tr2) = plan(bn)
    vmem_limit = int(min(max(total + (4 << 20), 32 << 20), 60 << 20))
    return int(bn), int(n_tiles), int(tr1), int(tr2), vmem_limit


def _endnet_loss_kernel(logits_ref, target_ref, weight_ref,
                        de1_ref, ori1_ref, de2_ref, ori2_ref,
                        out_ref,
                        acc_num_ref, acc_den_ref, acc_sse1_ref, acc_sse2_ref,
                        *, class_axis):
    step = pl.program_id(0)
    nsteps = pl.num_programs(0)

    @pl.when(step == 0)
    def _init():
        acc_num_ref[...] = jnp.zeros_like(acc_num_ref)
        acc_den_ref[...] = jnp.zeros_like(acc_den_ref)
        acc_sse1_ref[...] = jnp.zeros_like(acc_sse1_ref)
        acc_sse2_ref[...] = jnp.zeros_like(acc_sse2_ref)

    # ---- weighted cross entropy: element-wise partial sums ------------------
    logits = logits_ref[...].astype(jnp.float32)
    m = jnp.max(logits, axis=class_axis, keepdims=True)
    lse = jnp.log(jnp.sum(jnp.exp(logits - m), axis=class_axis, keepdims=True)) + m
    cls = jax.lax.broadcasted_iota(jnp.int32, logits.shape, class_axis)
    # fused one-hot * class-weight; padded entries carry target == -1 -> 0
    t = jnp.where(cls == target_ref[...], weight_ref[...].astype(jnp.float32), 0.0)
    acc_den_ref[...] += t
    acc_num_ref[...] += t * (lse - logits)          # == t * (-log_softmax(out))

    # ---- MSE partial sums (lane-dense slabs; padding is 0 - 0 = 0) ----------
    d1 = de1_ref[...].astype(jnp.float32) - ori1_ref[...].astype(jnp.float32)
    acc_sse1_ref[...] += d1 * d1
    d2 = de2_ref[...].astype(jnp.float32) - ori2_ref[...].astype(jnp.float32)
    acc_sse2_ref[...] += d2 * d2

    # ---- last step: single cross-lane reduction + lane-dense store ----------
    @pl.when(step == nsteps - 1)
    def _finalize():
        ce_num = jnp.sum(acc_num_ref[...])
        ce_den = jnp.sum(acc_den_ref[...])
        sse1 = jnp.sum(acc_sse1_ref[...])
        sse2 = jnp.sum(acc_sse2_ref[...])
        row = jax.lax.broadcasted_iota(jnp.int32, (_SUBLANES, _LANES), 0)
        lane = jax.lax.broadcasted_iota(jnp.int32, (_SUBLANES, _LANES), 1)
        vec = jnp.where((row == 0) & (lane == 0), ce_num, 0.0)
        vec = vec + jnp.where((row == 0) & (lane == 1), ce_den, 0.0)
        vec = vec + jnp.where((row == 0) & (lane == 2), sse1, 0.0)
        vec = vec + jnp.where((row == 0) & (lane == 3), sse2, 0.0)
        out_ref[...] = vec


def endnet_loss(output, target, class_weight):
    """output = (out, de_x1, de_x2, ori_x1, ori_x2); target: int class ids [N]."""
    out, de_x1, de_x2, ori_x1, ori_x2 = output
    out = jnp.asarray(out)
    n, c = out.shape

    # MSE is purely elementwise -> flatten and repack lane-dense below.
    de1 = jnp.asarray(de_x1).reshape(-1)
    o1 = jnp.asarray(ori_x1).reshape(-1)
    de2 = jnp.asarray(de_x2).reshape(-1)
    o2 = jnp.asarray(ori_x2).reshape(-1)
    l1, l2 = int(de1.size), int(de2.size)

    transposed = c < _LANES   # small-C: batch on lanes, classes on sublanes
    bn, n_tiles, tr1, tr2, vmem_limit = _plan_tiles(n, c, l1, l2, transposed)
    np_rows = n_tiles * bn

    tgt = jnp.asarray(target).astype(jnp.int32).reshape(-1)
    tgt_p = jnp.pad(tgt, (0, np_rows - n), constant_values=-1)   # -1 never matches
    w = jnp.asarray(class_weight).astype(jnp.float32)

    if transposed:
        logits = jnp.pad(out, ((0, np_rows - n), (0, 0))).T      # (C, NP)
        tgt2d = tgt_p.reshape(1, np_rows)
        w2d = w.reshape(c, 1)
        class_axis = 0
        ce_block = (c, bn)
        ce_map = lambda i: (0, i)
        tgt_block = (1, bn)
        w_block = (c, 1)
        acc_ce_shape = (c, bn)
    else:
        logits = jnp.pad(out, ((0, np_rows - n), (0, 0)))        # (NP, C)
        tgt2d = tgt_p.reshape(np_rows, 1)
        w2d = w.reshape(1, c)
        class_axis = 1
        ce_block = (bn, c)
        ce_map = lambda i: (i, 0)
        tgt_block = (bn, 1)
        w_block = (1, c)
        acc_ce_shape = (bn, c)

    def pack_slab(x, tr):
        rp = n_tiles * tr
        x = jnp.pad(x, (0, rp * _LANES - x.size))
        return x.reshape(rp, _LANES)

    de1s, o1s = pack_slab(de1, tr1), pack_slab(o1, tr1)
    de2s, o2s = pack_slab(de2, tr2), pack_slab(o2, tr2)

    kernel = functools.partial(_endnet_loss_kernel, class_axis=class_axis)

    itemsize = jnp.dtype(out.dtype).itemsize
    bytes_accessed = int(itemsize * np_rows * c + 4 * np_rows + 4 * c
                         + jnp.dtype(de1s.dtype).itemsize * 2 * n_tiles * tr1 * _LANES
                         + jnp.dtype(de2s.dtype).itemsize * 2 * n_tiles * tr2 * _LANES
                         + 4 * _SUBLANES * _LANES)
    cost = pl.CostEstimate(
        flops=int(8 * n * c + 3 * (l1 + l2)),
        transcendentals=int(n * c + n),
        bytes_accessed=bytes_accessed)

    partials = pl.pallas_call(
        kernel,
        out_shape=jax.ShapeDtypeStruct((_SUBLANES, _LANES), jnp.float32),
        grid_spec=pltpu.PrefetchScalarGridSpec(
            num_scalar_prefetch=0,
            grid=(n_tiles,),
            in_specs=[
                pl.BlockSpec(ce_block, ce_map),                 # logits tile
                pl.BlockSpec(tgt_block, ce_map),                # target tile
                pl.BlockSpec(w_block, lambda i: (0, 0)),        # class weights, resident
                pl.BlockSpec((tr1, _LANES), lambda i: (i, 0)),  # de_x1 slab tile
                pl.BlockSpec((tr1, _LANES), lambda i: (i, 0)),  # ori_x1 slab tile
                pl.BlockSpec((tr2, _LANES), lambda i: (i, 0)),  # de_x2 slab tile
                pl.BlockSpec((tr2, _LANES), lambda i: (i, 0)),  # ori_x2 slab tile
            ],
            out_specs=pl.BlockSpec((_SUBLANES, _LANES), lambda i: (0, 0)),
            scratch_shapes=[
                pltpu.VMEM(acc_ce_shape, jnp.float32),          # ce numerator partials
                pltpu.VMEM(acc_ce_shape, jnp.float32),          # ce denominator partials
                pltpu.VMEM((tr1, _LANES), jnp.float32),         # sse1 partials
                pltpu.VMEM((tr2, _LANES), jnp.float32),         # sse2 partials
            ],
        ),
        compiler_params=pltpu.CompilerParams(
            dimension_semantics=("arbitrary",),
            vmem_limit_bytes=vmem_limit),
        cost_estimate=cost,
    )(logits, tgt2d, w2d, de1s, o1s, de2s, o2s)

    sums = partials[0, :4]
    ce = sums[0] / sums[1]
    mse1 = sums[2] / float(l1)
    mse2 = sums[3] / float(l2)
    return ce + mse1 + mse2


def endnet_loss_ref(output, target, class_weight):
    """Plain-JAX reference mirroring PyTorch semantics."""
    out, de_x1, de_x2, ori_x1, ori_x2 = output
    logp = jax.nn.log_softmax(out.astype(jnp.float32), axis=-1)
    nll = -jnp.take_along_axis(logp, target[:, None], axis=-1)[:, 0]
    w = class_weight[target]
    ce = jnp.sum(w * nll) / jnp.sum(w)
    mse1 = jnp.mean((de_x1 - ori_x1) ** 2)
    mse2 = jnp.mean((de_x2 - ori_x2) ** 2)
    return ce + mse1 + mse2


if __name__ == "__main__":
    key = jax.random.PRNGKey(0)
    k1, k2, k3, k4, k5, k6 = jax.random.split(key, 6)

    N, C = 8, 4           # batch, classes
    D1, D2 = 32, 16       # decoder/original feature dims

    out = jax.random.normal(k1, (N, C), dtype=jnp.float32)
    de_x1 = jax.random.normal(k2, (N, D1), dtype=jnp.float32)
    ori_x1 = jax.random.normal(k3, (N, D1), dtype=jnp.float32)
    de_x2 = jax.random.normal(k4, (N, D2), dtype=jnp.float32)
    ori_x2 = jax.random.normal(k5, (N, D2), dtype=jnp.float32)
    target = jax.random.randint(k6, (N,), 0, C, dtype=jnp.int32)

    # deterministic class weights (the module's __init__ takes `weight`)
    class_weight = jnp.linspace(0.5, 1.5, C, dtype=jnp.float32)

    output = (out, de_x1, de_x2, ori_x1, ori_x2)

    loss = jax.block_until_ready(endnet_loss(output, target, class_weight))
    ref = jax.block_until_ready(endnet_loss_ref(output, target, class_weight))

    assert jnp.allclose(loss, ref, rtol=1e-5, atol=1e-5), (loss, ref)
    print("KERNEL_OK")
</pallas_src>

<mosaic_0001>
module attributes {stable_mosaic.version = 11 : i64} {
  func.func @_endnet_loss_kernel(%arg0: i32, %arg1: memref<4x128xf32, #tpu.memory_space<vmem>>, %arg2: memref<1x128xi32, #tpu.memory_space<vmem>>, %arg3: memref<4x1xf32, #tpu.memory_space<vmem>>, %arg4: memref<8x128xf32, #tpu.memory_space<vmem>>, %arg5: memref<8x128xf32, #tpu.memory_space<vmem>>, %arg6: memref<8x128xf32, #tpu.memory_space<vmem>>, %arg7: memref<8x128xf32, #tpu.memory_space<vmem>>, %arg8: memref<8x128xf32, #tpu.memory_space<vmem>>, %arg9: memref<4x128xf32, #tpu.memory_space<vmem>>, %arg10: memref<4x128xf32, #tpu.memory_space<vmem>>, %arg11: memref<8x128xf32, #tpu.memory_space<vmem>>, %arg12: memref<8x128xf32, #tpu.memory_space<vmem>>) attributes {dimension_semantics = [#tpu.dimension_semantics<arbitrary>], iteration_bounds = array<i64: 1>, scalar_prefetch = 0 : i64, scratch_operands = 4 : i64, tpu.core_type = #tpu.core_type<tc>, window_params = [{transform_indices = @transform_0, window_bounds = array<i64: 4, 128>}, {transform_indices = @transform_1, window_bounds = array<i64: 1, 128>}, {pipeline_mode = #tpu.pipeline_mode<synchronous>, transform_indices = @transform_2, window_bounds = array<i64: 4, 1>}, {transform_indices = @transform_3, window_bounds = array<i64: 8, 128>}, {transform_indices = @transform_4, window_bounds = array<i64: 8, 128>}, {transform_indices = @transform_5, window_bounds = array<i64: 8, 128>}, {transform_indices = @transform_6, window_bounds = array<i64: 8, 128>}, {pipeline_mode = #tpu.pipeline_mode<synchronous>, transform_indices = @transform_7, window_bounds = array<i64: 8, 128>}]} {
    %c0_i32 = arith.constant 0 : i32
    %0 = arith.cmpi eq, %arg0, %c0_i32 : i32
    %1 = arith.extui %0 : i1 to i32
    %c0_i32_0 = arith.constant 0 : i32
    %2 = arith.cmpi ne, %1, %c0_i32_0 : i32
    scf.if %2 {
      %cst_34 = arith.constant 0.000000e+00 : f32
      %48 = vector.broadcast %cst_34 : f32 to vector<4x128xf32>
      %c0_35 = arith.constant 0 : index
      %c0_36 = arith.constant 0 : index
      %49 = vector.load %arg9[%c0_35, %c0_36] : memref<4x128xf32, #tpu.memory_space<vmem>>, vector<4x128xf32>
      tpu.vector_store %arg9[%c0_35, %c0_36], %48 {strides = array<i32>} : memref<4x128xf32, #tpu.memory_space<vmem>>, vector<4x128xf32>,
      %cst_37 = arith.constant 0.000000e+00 : f32
      %50 = vector.broadcast %cst_37 : f32 to vector<4x128xf32>
      %c0_38 = arith.constant 0 : index
      %c0_39 = arith.constant 0 : index
      %51 = vector.load %arg10[%c0_38, %c0_39] : memref<4x128xf32, #tpu.memory_space<vmem>>, vector<4x128xf32>
      tpu.vector_store %arg10[%c0_38, %c0_39], %50 {strides = array<i32>} : memref<4x128xf32, #tpu.memory_space<vmem>>, vector<4x128xf32>,
      %cst_40 = arith.constant 0.000000e+00 : f32
      %52 = vector.broadcast %cst_40 : f32 to vector<8x128xf32>
      %c0_41 = arith.constant 0 : index
      %c0_42 = arith.constant 0 : index
      %53 = vector.load %arg11[%c0_41, %c0_42] : memref<8x128xf32, #tpu.memory_space<vmem>>, vector<8x128xf32>
      tpu.vector_store %arg11[%c0_41, %c0_42], %52 {strides = array<i32>} : memref<8x128xf32, #tpu.memory_space<vmem>>, vector<8x128xf32>,
      %cst_43 = arith.constant 0.000000e+00 : f32
      %54 = vector.broadcast %cst_43 : f32 to vector<8x128xf32>
      %c0_44 = arith.constant 0 : index
      %c0_45 = arith.constant 0 : index
      %55 = vector.load %arg12[%c0_44, %c0_45] : memref<8x128xf32, #tpu.memory_space<vmem>>, vector<8x128xf32>
      tpu.vector_store %arg12[%c0_44, %c0_45], %54 {strides = array<i32>} : memref<8x128xf32, #tpu.memory_space<vmem>>, vector<8x128xf32>,
    } else {
    }
    %c0 = arith.constant 0 : index
    %c0_1 = arith.constant 0 : index
    %3 = vector.load %arg1[%c0, %c0_1] : memref<4x128xf32, #tpu.memory_space<vmem>>, vector<4x128xf32>
    %cst = arith.constant dense<0xFF800000> : vector<128xf32>
    %4 = vector.multi_reduction <maximumf>, %3, %cst [0] : vector<4x128xf32> to vector<128xf32>
    %5 = vector.shape_cast %4 : vector<128xf32> to vector<1x128xf32>
    %6 = vector.broadcast %5 : vector<1x128xf32> to vector<4x128xf32>
    %7 = arith.subf %3, %6 : vector<4x128xf32>
    %8 = math.exp %7 : vector<4x128xf32>
    %cst_2 = arith.constant dense<0.000000e+00> : vector<128xf32>
    %9 = vector.multi_reduction <add>, %8, %cst_2 [0] : vector<4x128xf32> to vector<128xf32>
    %10 = vector.shape_cast %9 : vector<128xf32> to vector<1x128xf32>
    %11 = math.log %10 : vector<1x128xf32>
    %12 = arith.addf %11, %5 : vector<1x128xf32>
    %13 = tpu.iota {dimensions = array<i32: 0>} : vector<4x128xi32>
    %c0_3 = arith.constant 0 : index
    %c0_4 = arith.constant 0 : index
    %14 = vector.load %arg2[%c0_3, %c0_4] : memref<1x128xi32, #tpu.memory_space<vmem>>, vector<1x128xi32>
    %15 = vector.broadcast %14 : vector<1x128xi32> to vector<4x128xi32>
    %16 = arith.cmpi eq, %13, %15 : vector<4x128xi32>
    %c0_5 = arith.constant 0 : index
    %c0_6 = arith.constant 0 : index
    %17 = vector.load %arg3[%c0_5, %c0_6] : memref<4x1xf32, #tpu.memory_space<vmem>>, vector<4x1xf32>
    %cst_7 = arith.constant 0.000000e+00 : f32
    %18 = vector.shape_cast %17 : vector<4x1xf32> to vector<4x1xf32>
    %19 = vector.broadcast %18 : vector<4x1xf32> to vector<4x128xf32>
    %20 = vector.broadcast %cst_7 : f32 to vector<4x128xf32>
    %21 = arith.select %16, %19, %20 : vector<4x128xi1>, vector<4x128xf32>
    %c0_8 = arith.constant 0 : index
    %c0_9 = arith.constant 0 : index
    %22 = vector.load %arg10[%c0_8, %c0_9] : memref<4x128xf32, #tpu.memory_space<vmem>>, vector<4x128xf32>
    %23 = arith.addf %22, %21 : vector<4x128xf32>
    %c0_10 = arith.constant 0 : index
    %c0_11 = arith.constant 0 : index
    %24 = vector.load %arg10[%c0_10, %c0_11] : memref<4x128xf32, #tpu.memory_space<vmem>>, vector<4x128xf32>
    tpu.vector_store %arg10[%c0_10, %c0_11], %23 {strides = array<i32>} : memref<4x128xf32, #tpu.memory_space<vmem>>, vector<4x128xf32>,
    %c0_12 = arith.constant 0 : index
    %c0_13 = arith.constant 0 : index
    %25 = vector.load %arg9[%c0_12, %c0_13] : memref<4x128xf32, #tpu.memory_space<vmem>>, vector<4x128xf32>
    %26 = vector.broadcast %12 : vector<1x128xf32> to vector<4x128xf32>
    %27 = arith.subf %26, %3 : vector<4x128xf32>
    %28 = arith.mulf %21, %27 : vector<4x128xf32>
    %29 = arith.addf %25, %28 : vector<4x128xf32>
    %c0_14 = arith.constant 0 : index
    %c0_15 = arith.constant 0 : index
    %30 = vector.load %arg9[%c0_14, %c0_15] : memref<4x128xf32, #tpu.memory_space<vmem>>, vector<4x128xf32>
    tpu.vector_store %arg9[%c0_14, %c0_15], %29 {strides = array<i32>} : memref<4x128xf32, #tpu.memory_space<vmem>>, vector<4x128xf32>,
    %c0_16 = arith.constant 0 : index
    %c0_17 = arith.constant 0 : index
    %31 = vector.load %arg4[%c0_16, %c0_17] : memref<8x128xf32, #tpu.memory_space<vmem>>, vector<8x128xf32>
    %c0_18 = arith.constant 0 : index
    %c0_19 = arith.constant 0 : index
    %32 = vector.load %arg5[%c0_18, %c0_19] : memref<8x128xf32, #tpu.memory_space<vmem>>, vector<8x128xf32>
    %33 = arith.subf %31, %32 : vector<8x128xf32>
    %c0_20 = arith.constant 0 : index
    %c0_21 = arith.constant 0 : index
    %34 = vector.load %arg11[%c0_20, %c0_21] : memref<8x128xf32, #tpu.memory_space<vmem>>, vector<8x128xf32>
    %35 = arith.mulf %33, %33 : vector<8x128xf32>
    %36 = arith.addf %34, %35 : vector<8x128xf32>
    %c0_22 = arith.constant 0 : index
    %c0_23 = arith.constant 0 : index
    %37 = vector.load %arg11[%c0_22, %c0_23] : memref<8x128xf32, #tpu.memory_space<vmem>>, vector<8x128xf32>
    tpu.vector_store %arg11[%c0_22, %c0_23], %36 {strides = array<i32>} : memref<8x128xf32, #tpu.memory_space<vmem>>, vector<8x128xf32>,
    %c0_24 = arith.constant 0 : index
    %c0_25 = arith.constant 0 : index
    %38 = vector.load %arg6[%c0_24, %c0_25] : memref<8x128xf32, #tpu.memory_space<vmem>>, vector<8x128xf32>
    %c0_26 = arith.constant 0 : index
    %c0_27 = arith.constant 0 : index
    %39 = vector.load %arg7[%c0_26, %c0_27] : memref<8x128xf32, #tpu.memory_space<vmem>>, vector<8x128xf32>
    %40 = arith.subf %38, %39 : vector<8x128xf32>
    %c0_28 = arith.constant 0 : index
    %c0_29 = arith.constant 0 : index
    %41 = vector.load %arg12[%c0_28, %c0_29] : memref<8x128xf32, #tpu.memory_space<vmem>>, vector<8x128xf32>
    %42 = arith.mulf %40, %40 : vector<8x128xf32>
    %43 = arith.addf %41, %42 : vector<8x128xf32>
    %c0_30 = arith.constant 0 : index
    %c0_31 = arith.constant 0 : index
    %44 = vector.load %arg12[%c0_30, %c0_31] : memref<8x128xf32, #tpu.memory_space<vmem>>, vector<8x128xf32>
    tpu.vector_store %arg12[%c0_30, %c0_31], %43 {strides = array<i32>} : memref<8x128xf32, #tpu.memory_space<vmem>>, vector<8x128xf32>,
    %c0_i32_32 = arith.constant 0 : i32
    %45 = arith.cmpi eq, %arg0, %c0_i32_32 : i32
    %46 = arith.extui %45 : i1 to i32
    %c0_i32_33 = arith.constant 0 : i32
    %47 = arith.cmpi ne, %46, %c0_i32_33 : i32
    scf.if %47 {
      %c0_34 = arith.constant 0 : index
      %c0_35 = arith.constant 0 : index
      %48 = vector.load %arg9[%c0_34, %c0_35] : memref<4x128xf32, #tpu.memory_space<vmem>>, vector<4x128xf32>
      %49 = vector.shape_cast %48 : vector<4x128xf32> to vector<1x4x128xf32>
      %cst_36 = arith.constant dense<0.000000e+00> : vector<1xf32>
      %50 = vector.multi_reduction <add>, %49, %cst_36 [1, 2] : vector<1x4x128xf32> to vector<1xf32>
      %51 = vector.shape_cast %50 : vector<1xf32> to vector<1x1x1xf32>
      %52 = vector.extract %51[0, 0, 0] : f32 from vector<1x1x1xf32>
      %c0_37 = arith.constant 0 : index
      %c0_38 = arith.constant 0 : index
      %53 = vector.load %arg10[%c0_37, %c0_38] : memref<4x128xf32, #tpu.memory_space<vmem>>, vector<4x128xf32>
      %54 = vector.shape_cast %53 : vector<4x128xf32> to vector<1x4x128xf32>
      %cst_39 = arith.constant dense<0.000000e+00> : vector<1xf32>
      %55 = vector.multi_reduction <add>, %54, %cst_39 [1, 2] : vector<1x4x128xf32> to vector<1xf32>
      %56 = vector.shape_cast %55 : vector<1xf32> to vector<1x1x1xf32>
      %57 = vector.extract %56[0, 0, 0] : f32 from vector<1x1x1xf32>
      %c0_40 = arith.constant 0 : index
      %c0_41 = arith.constant 0 : index
      %58 = vector.load %arg11[%c0_40, %c0_41] : memref<8x128xf32, #tpu.memory_space<vmem>>, vector<8x128xf32>
      %59 = vector.shape_cast %58 : vector<8x128xf32> to vector<1x8x128xf32>
      %cst_42 = arith.constant dense<0.000000e+00> : vector<1xf32>
      %60 = vector.multi_reduction <add>, %59, %cst_42 [1, 2] : vector<1x8x128xf32> to vector<1xf32>
      %61 = vector.shape_cast %60 : vector<1xf32> to vector<1x1x1xf32>
      %62 = vector.extract %61[0, 0, 0] : f32 from vector<1x1x1xf32>
      %c0_43 = arith.constant 0 : index
      %c0_44 = arith.constant 0 : index
      %63 = vector.load %arg12[%c0_43, %c0_44] : memref<8x128xf32, #tpu.memory_space<vmem>>, vector<8x128xf32>
      %64 = vector.shape_cast %63 : vector<8x128xf32> to vector<1x8x128xf32>
      %cst_45 = arith.constant dense<0.000000e+00> : vector<1xf32>
      %65 = vector.multi_reduction <add>, %64, %cst_45 [1, 2] : vector<1x8x128xf32> to vector<1xf32>
      %66 = vector.shape_cast %65 : vector<1xf32> to vector<1x1x1xf32>
      %67 = vector.extract %66[0, 0, 0] : f32 from vector<1x1x1xf32>
      %68 = tpu.iota {dimensions = array<i32: 0>} : vector<8x128xi32>
      %69 = tpu.iota {dimensions = array<i32: 1>} : vector<8x128xi32>
      %c0_i32_46 = arith.constant 0 : i32
      %70 = vector.broadcast %c0_i32_46 : i32 to vector<8x128xi32>
      %71 = arith.cmpi eq, %68, %70 : vector<8x128xi32>
      %c0_i32_47 = arith.constant 0 : i32
      %72 = vector.broadcast %c0_i32_47 : i32 to vector<8x128xi32>
      %73 = arith.cmpi eq, %69, %72 : vector<8x128xi32>
      %74 = arith.andi %71, %73 : vector<8x128xi1>
      %cst_48 = arith.constant 0.000000e+00 : f32
      %75 = vector.broadcast %52 : f32 to vector<8x128xf32>
      %76 = vector.broadcast %cst_48 : f32 to vector<8x128xf32>
      %77 = arith.select %74, %75, %76 : vector<8x128xi1>, vector<8x128xf32>
      %c0_i32_49 = arith.constant 0 : i32
      %78 = vector.broadcast %c0_i32_49 : i32 to vector<8x128xi32>
      %79 = arith.cmpi eq, %68, %78 : vector<8x128xi32>
      %c1_i32 = arith.constant 1 : i32
      %80 = vector.broadcast %c1_i32 : i32 to vector<8x128xi32>
      %81 = arith.cmpi eq, %69, %80 : vector<8x128xi32>
      %82 = arith.andi %79, %81 : vector<8x128xi1>
      %cst_50 = arith.constant 0.000000e+00 : f32
      %83 = vector.broadcast %57 : f32 to vector<8x128xf32>
      %84 = vector.broadcast %cst_50 : f32 to vector<8x128xf32>
      %85 = arith.select %82, %83, %84 : vector<8x128xi1>, vector<8x128xf32>
      %86 = arith.addf %77, %85 : vector<8x128xf32>
      %c0_i32_51 = arith.constant 0 : i32
      %87 = vector.broadcast %c0_i32_51 : i32 to vector<8x128xi32>
      %88 = arith.cmpi eq, %68, %87 : vector<8x128xi32>
      %c2_i32 = arith.constant 2 : i32
      %89 = vector.broadcast %c2_i32 : i32 to vector<8x128xi32>
      %90 = arith.cmpi eq, %69, %89 : vector<8x128xi32>
      %91 = arith.andi %88, %90 : vector<8x128xi1>
      %cst_52 = arith.constant 0.000000e+00 : f32
      %92 = vector.broadcast %62 : f32 to vector<8x128xf32>
      %93 = vector.broadcast %cst_52 : f32 to vector<8x128xf32>
      %94 = arith.select %91, %92, %93 : vector<8x128xi1>, vector<8x128xf32>
      %95 = arith.addf %86, %94 : vector<8x128xf32>
      %c0_i32_53 = arith.constant 0 : i32
      %96 = vector.broadcast %c0_i32_53 : i32 to vector<8x128xi32>
      %97 = arith.cmpi eq, %68, %96 : vector<8x128xi32>
      %c3_i32 = arith.constant 3 : i32
      %98 = vector.broadcast %c3_i32 : i32 to vector<8x128xi32>
      %99 = arith.cmpi eq, %69, %98 : vector<8x128xi32>
      %100 = arith.andi %97, %99 : vector<8x128xi1>
      %cst_54 = arith.constant 0.000000e+00 : f32
      %101 = vector.broadcast %67 : f32 to vector<8x128xf32>
      %102 = vector.broadcast %cst_54 : f32 to vector<8x128xf32>
      %103 = arith.select %100, %101, %102 : vector<8x128xi1>, vector<8x128xf32>
      %104 = arith.addf %95, %103 : vector<8x128xf32>
      %c0_55 = arith.constant 0 : index
      %c0_56 = arith.constant 0 : index
      %105 = vector.load %arg8[%c0_55, %c0_56] : memref<8x128xf32, #tpu.memory_space<vmem>>, vector<8x128xf32>
      tpu.vector_store %arg8[%c0_55, %c0_56], %104 {strides = array<i32>} : memref<8x128xf32, #tpu.memory_space<vmem>>, vector<8x128xf32>,
    } else {
    }
    return
  }
  func.func @transform_0(%arg0: i32) -> (i32, i32) {
    %c0_i32 = arith.constant 0 : i32
    %c0_i32_0 = arith.constant 0 : i32
    return %c0_i32, %arg0 : i32, i32
  }
  func.func @transform_1(%arg0: i32) -> (i32, i32) {
    %c0_i32 = arith.constant 0 : i32
    %c0_i32_0 = arith.constant 0 : i32
    return %c0_i32, %arg0 : i32, i32
  }
  func.func @transform_2(%arg0: i32) -> (i32, i32) {
    %c0_i32 = arith.constant 0 : i32
    %c0_i32_0 = arith.constant 0 : i32
    %c0_i32_1 = arith.constant 0 : i32
    return %c0_i32, %c0_i32_0 : i32, i32
  }
  func.func @transform_3(%arg0: i32) -> (i32, i32) {
    %c0_i32 = arith.constant 0 : i32
    %c0_i32_0 = arith.constant 0 : i32
    return %arg0, %c0_i32 : i32, i32
  }
  func.func @transform_4(%arg0: i32) -> (i32, i32) {
    %c0_i32 = arith.constant 0 : i32
    %c0_i32_0 = arith.constant 0 : i32
    return %arg0, %c0_i32 : i32, i32
  }
  func.func @transform_5(%arg0: i32) -> (i32, i32) {
    %c0_i32 = arith.constant 0 : i32
    %c0_i32_0 = arith.constant 0 : i32
    return %arg0, %c0_i32 : i32, i32
  }
  func.func @transform_6(%arg0: i32) -> (i32, i32) {
    %c0_i32 = arith.constant 0 : i32
    %c0_i32_0 = arith.constant 0 : i32
    return %arg0, %c0_i32 : i32, i32
  }
  func.func @transform_7(%arg0: i32) -> (i32, i32) {
    %c0_i32 = arith.constant 0 : i32
    %c0_i32_0 = arith.constant 0 : i32
    %c0_i32_1 = arith.constant 0 : i32
    return %c0_i32, %c0_i32_0 : i32, i32
  }
}

</mosaic_0001>

<llo_original>
// kernel: tpu_custom_call.1
$region0: #{tpu_custom_call.1}
  #allocation0 [shape = 'u32[]', space=smem, size = 0x4, offset = 0x4, fixed_abs, tag = 'smem constant byte address 0x4 - core index']
  #allocation1 [shape = 'u32[144,128]{1,0:T(1,128)}', space=vmem, size = 0x12000, scoped, tag = 'internal scratch']
  #allocation2 [shape = 'f32[4,128]{1,0:T(4,128)}', space=vmem, size = 0x800, scoped, tag = 'scratch operand']
  #allocation3 [shape = 'f32[4,128]{1,0:T(4,128)}', space=vmem, size = 0x800, scoped, tag = 'scratch operand']
  #allocation4 [shape = 'f32[8,128]{1,0:T(8,128)}', space=vmem, size = 0x1000, scoped, tag = 'scratch operand']
  #allocation5 [shape = 'f32[8,128]{1,0:T(8,128)}', space=vmem, size = 0x1000, scoped, tag = 'scratch operand']
  %s0 = inlined_call_operand.hbm [shape: f32[4,128], index: 0, kind: input, shape index: {}]
  %s1 = inlined_call_operand.hbm [shape: s32[1,128], index: 1, kind: input, shape index: {}]
  %s2 = inlined_call_operand.vmem [shape: f32[4,1], index: 2, kind: input, shape index: {}]
  %s3 = inlined_call_operand.vmem [shape: f32[8,128], index: 3, kind: input, shape index: {}]
  %s4 = inlined_call_operand.vmem [shape: f32[8,128], index: 4, kind: input, shape index: {}]
  %s5 = inlined_call_operand.hbm [shape: f32[8,128], index: 5, kind: input, shape index: {}]
  %s6 = inlined_call_operand.vmem [shape: f32[8,128], index: 6, kind: input, shape index: {}]
  %s7 = inlined_call_operand.hbm [shape: f32[8,128], index: 7, kind: output, shape index: {}]
  %s8 = sld [smem:[#allocation0]]
  $region58: #{tpu_custom_call.1} parent=0
    _
  %s10 = ssub.s32 1, %s8
  %s11 = scalar_select 0, %s10, %s8
  $region1: #{tpu_custom_call.1} parent=0
    #allocation6 [shape = 'u8[2048]{0}', space=vmem, size = 0x800, scoped, tag = 'input window, operand 0, single buffered']
    #allocation7 [shape = 's32[1]{0}', space=sflag, size = 0x4, scoped, tag = 'scoped memory for tpu_custom_call.1']
    #allocation8 [shape = 's32[1]{0}', space=sflag, size = 0x4, scoped, tag = 'scoped memory for tpu_custom_call.1']
    #allocation9 [shape = 'u8[512]{0}', space=vmem, size = 0x400, scoped, tag = 'input window, operand 1, single buffered']
    #allocation10 [shape = 's32[1]{0}', space=sflag, size = 0x4, scoped, tag = 'scoped memory for tpu_custom_call.1']
    #allocation11 [shape = 'u8[4096]{0}', space=vmem, size = 0x1000, scoped, tag = 'input window, operand 5, single buffered']
    #allocation12 [shape = 'u8[4096]{0}', space=vmem, size = 0x1000, scoped, tag = 'output window, operand 0, single buffered']
    %12 = vsyncpa [#allocation7], 0
    %13 = vsyncpa [#allocation10], 0
    %14 = vsyncpa [#allocation8], 0
    // Predicated region
    $region2: #{tpu_custom_call.1} parent=1 // pred_check
      _
    $region3: #{tpu_custom_call.1} parent=1 // pred_check_branch
      %16 = sbr.rel (0) target = $region5
    $region4: #{tpu_custom_call.1} parent=1 // pred_region
      %s18 = ssub.s32 64, 64
      %19 = vsyncadd [#allocation7], %s18
      %s21 = sshll.u32 [#allocation6], 4
      %s22 = int_to_ptr.vmem [resolvable:$true] %s21
      %24 = dma.hbm_to_vmem [thread:$0]  %s0, 64, %s22, [#allocation7]
    $region5: #{tpu_custom_call.1} parent=1 // pred_fallthru
      _
    // Predicated region
    $region6: #{tpu_custom_call.1} parent=1 // pred_check
      _
    $region7: #{tpu_custom_call.1} parent=1 // pred_check_branch
      %26 = sbr.rel (0) target = $region9
    $region8: #{tpu_custom_call.1} parent=1 // pred_region
      %s28 = ssub.s32 16, 16
      %29 = vsyncadd [#allocation10], %s28
      %s31 = sshll.u32 [#allocation9], 4
      %s32 = int_to_ptr.vmem [resolvable:$true] %s31
      %34 = dma.hbm_to_vmem [thread:$0]  %s1, 16, %s32, [#allocation10]
    $region9: #{tpu_custom_call.1} parent=1 // pred_fallthru
      _
    // Predicated region
    $region10: #{tpu_custom_call.1} parent=1 // pred_check
      _
    $region11: #{tpu_custom_call.1} parent=1 // pred_check_branch
      %36 = sbr.rel (0) target = $region13
    $region12: #{tpu_custom_call.1} parent=1 // pred_region
      _
    $region13: #{tpu_custom_call.1} parent=1 // pred_fallthru
      _
    // Predicated region
    $region14: #{tpu_custom_call.1} parent=1 // pred_check
      _
    $region15: #{tpu_custom_call.1} parent=1 // pred_check_branch
      %38 = sbr.rel (0) target = $region17
    $region16: #{tpu_custom_call.1} parent=1 // pred_region
      _
    $region17: #{tpu_custom_call.1} parent=1 // pred_fallthru
      _
    // Predicated region
    $region18: #{tpu_custom_call.1} parent=1 // pred_check
      _
    $region19: #{tpu_custom_call.1} parent=1 // pred_check_branch
      %40 = sbr.rel (0) target = $region21
    $region20: #{tpu_custom_call.1} parent=1 // pred_region
      _
    $region21: #{tpu_custom_call.1} parent=1 // pred_fallthru
      _
    // Predicated region
    $region22: #{tpu_custom_call.1} parent=1 // pred_check
      _
    $region23: #{tpu_custom_call.1} parent=1 // pred_check_branch
      %42 = sbr.rel (0) target = $region25
    $region24: #{tpu_custom_call.1} parent=1 // pred_region
      %s44 = ssub.s32 128, 128
      %45 = vsyncadd [#allocation10], %s44
      %s47 = sshll.u32 [#allocation11], 4
      %s48 = int_to_ptr.vmem [resolvable:$true] %s47
      %50 = dma.hbm_to_vmem [thread:$0]  %s5, 128, %s48, [#allocation10]
    $region25: #{tpu_custom_call.1} parent=1 // pred_fallthru
      _
    // Predicated region
    $region26: #{tpu_custom_call.1} parent=1 // pred_check
      _
    $region27: #{tpu_custom_call.1} parent=1 // pred_check_branch
      %52 = sbr.rel (0) target = $region29
    $region28: #{tpu_custom_call.1} parent=1 // pred_region
      _
    $region29: #{tpu_custom_call.1} parent=1 // pred_fallthru
      _
    // Predicated region
    $region30: #{tpu_custom_call.1} parent=1 // pred_check
      _
    $region31: #{tpu_custom_call.1} parent=1 // pred_check_branch
      %54 = sbr.rel (0) target = $region33
    $region32: #{tpu_custom_call.1} parent=1 // pred_region
      %55 = dma.done [#allocation7], 64
    $region33: #{tpu_custom_call.1} parent=1 // pred_fallthru
      _
    // Predicated region
    $region34: #{tpu_custom_call.1} parent=1 // pred_check
      _
    $region35: #{tpu_custom_call.1} parent=1 // pred_check_branch
      %57 = sbr.rel (0) target = $region37
    $region36: #{tpu_custom_call.1} parent=1 // pred_region
      %58 = dma.done [#allocation10], 16
    $region37: #{tpu_custom_call.1} parent=1 // pred_fallthru
      _
    // Predicated region
    $region38: #{tpu_custom_call.1} parent=1 // pred_check
      _
    $region39: #{tpu_custom_call.1} parent=1 // pred_check_branch
      %60 = sbr.rel (0) target = $region41
    $region40: #{tpu_custom_call.1} parent=1 // pred_region
      %61 = dma.done [#allocation10], 128
    $region41: #{tpu_custom_call.1} parent=1 // pred_fallthru
      _
    %p62 = scmp.eq.s32.totalorder 0, 0
    // Predicated region
    $region42: #{tpu_custom_call.1} parent=1 // pred_check
      %p63 = pneg %p62
    $region43: #{tpu_custom_call.1} parent=1 // pred_check_branch
      %65 = sbr.rel (%p63) target = $region45
    $region44: #{tpu_custom_call.1} parent=1 // pred_region
      %66 = vst [vmem:[#allocation2] sm:$0xf] 0.0
      %67 = vst [vmem:[#allocation3] sm:$0xf] 0.0
      %68 = vst [vmem:[#allocation4] sm:$0xff] 0.0
      %69 = vst [vmem:[#allocation5] sm:$0xff] 0.0
    $region45: #{tpu_custom_call.1} parent=1 // pred_fallthru
      _
    %v70 = vld [vmem:[#allocation6] sm:$0xf]
    %vm71 = vcmask 1043456
    %v72 = vsel %vm71, %v70, -inf
    %v73 = vrot.slane %v72, 4
    %v74 = vmax.f32 %v72, %v73
    %v75 = vrot.slane %v74, 2
    %v76 = vmax.f32 %v74, %v75
    %v77 = vrot.slane %v76, 1
    %v78 = vmax.f32 %v76, %v77
    %v79 = vsub.f32 %v70, %v78
    %v80 = vmul.f32 %v79, 1.442695
    %v81 = vpow.pop %v80
    %v82 = vsel %vm71, %v81, 0.0
    %v83 = vrot.slane %v82, 4
    %v84 = vadd.f32 %v82, %v83
    %v85 = vrot.slane %v84, 2
    %v86 = vadd.f32 %v84, %v85
    %v87 = vrot.slane %v86, 1
    %v88 = vadd.f32 %v86, %v87
    %v89 = vlog2.pop %v88
    %v90 = vmul.f32 %v89, 0.6931472
    %v91 = vadd.f32 %v90, %v78
    %v92 = vlaneseq
    %v93 = vshrl.u32 %v92, 7
    %v94 = vld [vmem:[#allocation9] sm:$0x1]
    %v95 = vlaneseq
    %v96 = vshrl.u32 %v95, 7
    %v97 = vsub.s32 0, %v96
    %v98 = vrot.slane %v94, %v97
    %vm99 = vcmp.eq.s32.totalorder %v93, %v98
    %v100 = vld [vmem:[%s2] sm:$0xf]
    %102 = vset.pattern.permute.xlu0 0
    %103 = vperm.xlu0 %102, %v100
    %v104 = vpop.permute.xlu0 %103
    %v106 = vsel %vm99, %v104, 0.0
    %v107 = vld [vmem:[#allocation3] sm:$0xf]
    %v108 = vadd.f32 %v107, %v106
    %109 = vst [vmem:[#allocation3] sm:$0xf] %v108
    %v110 = vld [vmem:[#allocation2] sm:$0xf]
    %v111 = vsub.f32 %v91, %v70
    %v112 = vmul.f32 %v106, %v111
    %v113 = vadd.f32 %v110, %v112
    %114 = vst [vmem:[#allocation2] sm:$0xf] %v113
    %v115 = vld [vmem:[%s3] sm:$0xff]
    %v116 = vld [vmem:[%s4] sm:$0xff]
    %v117 = vsub.f32 %v115, %v116
    %v118 = vld [vmem:[#allocation4] sm:$0xff]
    %v119 = vmul.f32 %v117, %v117
    %v120 = vadd.f32 %v118, %v119
    %121 = vst [vmem:[#allocation4] sm:$0xff] %v120
    %v122 = vld [vmem:[#allocation11] sm:$0xff]
    %v123 = vld [vmem:[%s6] sm:$0xff]
    %v124 = vsub.f32 %v122, %v123
    %v125 = vld [vmem:[#allocation5] sm:$0xff]
    %v126 = vmul.f32 %v124, %v124
    %v127 = vadd.f32 %v125, %v126
    %128 = vst [vmem:[#allocation5] sm:$0xff] %v127
    // Predicated region
    $region46: #{tpu_custom_call.1} parent=1 // pred_check
      %p129 = pneg %p62
    $region47: #{tpu_custom_call.1} parent=1 // pred_check_branch
      %131 = sbr.rel (%p129) target = $region49
    $region48: #{tpu_custom_call.1} parent=1 // pred_region
      %v132 = vld [vmem:[#allocation2] sm:$0xf]
      %v133 = vsel %vm71, %v132, 0.0
      %134 = vadd.xlane.f32.xlu0 %v133
      %v135 = vpop.xlane.xlu0 %134
      %v136 = vrot.slane %v135, 4
      %v137 = vadd.f32 %v135, %v136
      %v138 = vrot.slane %v137, 2
      %v139 = vadd.f32 %v137, %v138
      %v140 = vrot.slane %v139, 1
      %v141 = vadd.f32 %v139, %v140
      %s142 = vtos %v141
      %v143 = vld [vmem:[#allocation3] sm:$0xf]
      %v144 = vsel %vm71, %v143, 0.0
      %145 = vadd.xlane.f32.xlu0 %v144
      %v146 = vpop.xlane.xlu0 %145
      %v147 = vrot.slane %v146, 4
      %v148 = vadd.f32 %v146, %v147
      %v149 = vrot.slane %v148, 2
      %v150 = vadd.f32 %v148, %v149
      %v151 = vrot.slane %v150, 1
      %v152 = vadd.f32 %v150, %v151
      %s153 = vtos %v152
      %v154 = vld [vmem:[#allocation4] sm:$0xff]
      %155 = vadd.xlane.f32.xlu0 %v154
      %v156 = vpop.xlane.xlu0 %155
      %v157 = vrot.slane %v156, 4
      %v158 = vadd.f32 %v156, %v157
      %v159 = vrot.slane %v158, 2
      %v160 = vadd.f32 %v158, %v159
      %v161 = vrot.slane %v160, 1
      %v162 = vadd.f32 %v160, %v161
      %s163 = vtos %v162
      %v164 = vld [vmem:[#allocation5] sm:$0xff]
      %165 = vadd.xlane.f32.xlu0 %v164
      %v166 = vpop.xlane.xlu0 %165
      %v167 = vrot.slane %v166, 4
      %v168 = vadd.f32 %v166, %v167
      %v169 = vrot.slane %v168, 2
      %v170 = vadd.f32 %v168, %v169
      %v171 = vrot.slane %v170, 1
      %v172 = vadd.f32 %v170, %v171
      %s173 = vtos %v172
      %v174 = vlaneseq
      %v175 = vand.u32 %v174, 127
      %vm176 = vcmp.eq.s32.totalorder %v93, 0
      %vm177 = vcmp.eq.s32.totalorder %v175, 0
      %vm178 = vmand %vm176, %vm177
      %v179 = vstv %s142
      %v180 = vsel %vm178, %v179, 0.0
      %vm181 = vcmp.eq.s32.totalorder %v175, 1
      %vm182 = vmand %vm176, %vm181
      %v183 = vstv %s153
      %v184 = vsel %vm182, %v183, 0.0
      %v185 = vadd.f32 %v180, %v184
      %vm186 = vcmp.eq.s32.totalorder %v175, 2
      %vm187 = vmand %vm176, %vm186
      %v188 = vstv %s163
      %v189 = vsel %vm187, %v188, 0.0
      %v190 = vadd.f32 %v185, %v189
      %vm191 = vcmp.eq.s32.totalorder %v175, 3
      %vm192 = vmand %vm176, %vm191
      %v193 = vstv %s173
      %v194 = vsel %vm192, %v193, 0.0
      %v195 = vadd.f32 %v190, %v194
      %196 = vst [vmem:[#allocation12] sm:$0xff] %v195
    $region49: #{tpu_custom_call.1} parent=1 // pred_fallthru
      _
    // Predicated region
    $region50: #{tpu_custom_call.1} parent=1 // pred_check
      _
    $region51: #{tpu_custom_call.1} parent=1 // pred_check_branch
      %198 = sbr.rel (0) target = $region53
    $region52: #{tpu_custom_call.1} parent=1 // pred_region
      %s200 = ssub.s32 128, 128
      %201 = vsyncadd [#allocation8], %s200
      %s203 = sshll.u32 [#allocation12], 4
      %s204 = int_to_ptr.vmem [resolvable:$true] %s203
      %206 = dma.vmem_to_hbm [thread:$0]  %s204, 128, %s7, [#allocation8]
    $region53: #{tpu_custom_call.1} parent=1 // pred_fallthru
      _
    // Predicated region
    $region54: #{tpu_custom_call.1} parent=1 // pred_check
      _
    $region55: #{tpu_custom_call.1} parent=1 // pred_check_branch
      %208 = sbr.rel (0) target = $region57
    $region56: #{tpu_custom_call.1} parent=1 // pred_region
      %209 = dma.done [#allocation8], 128
    $region57: #{tpu_custom_call.1} parent=1 // pred_fallthru
      _
    %210 = vsyncpa [#allocation7], 1
    %211 = vsyncpa [#allocation10], 1
    %212 = vsyncpa [#allocation8], 1

</llo_original>
